<compile_context>
chip_gen: v5e
topology: v5e:2x2
jax: 0.10.0
libtpu: 0.0.40
codegen_flags: <defaults>
</compile_context>

<pallas_src>
import functools

import jax
import jax.numpy as jnp
from jax.experimental import pallas as pl
from jax.experimental.pallas import tpu as pltpu

_INV_SQRT_2 = 0.7071067811865476


def _round_up(x, m):
    return (x + m - 1) // m * m


def _cdiv(a, b):
    return (a + b - 1) // b


def _gelu(h, approximate):
    if approximate:
        # tanh-based GELU -> transcendental goes to the (otherwise idle) EUP slot
        return jax.nn.gelu(h, approximate=True)
    # exact erf GELU, matching torch.nn.GELU() default
    return 0.5 * h * (1.0 + jax.lax.erf(h * _INV_SQRT_2))


# ---------------------------------------------------------------------------
# Kernels
# ---------------------------------------------------------------------------
def _mlp_kernel_fused(x_ref, w1_ref, b1_ref, w2_ref, b2_ref, o_ref, *,
                      approximate_gelu):
    """Single hidden step: weights fully resident in VMEM, no accumulator."""
    h = jnp.dot(x_ref[...], w1_ref[...], preferred_element_type=jnp.float32)
    h = _gelu(h + b1_ref[...], approximate_gelu)
    # dropout(p=0.0) is the identity -> nothing to do
    y = jnp.dot(h.astype(w2_ref.dtype), w2_ref[...],
                preferred_element_type=jnp.float32)
    o_ref[...] = (y + b2_ref[...]).astype(o_ref.dtype)


def _mlp_kernel_htiled(x_ref, w1_ref, b1_ref, w2_ref, b2_ref, o_ref, acc_ref,
                       *, approximate_gelu):
    """Hidden dim tiled as an inner reduction axis with f32 VMEM accumulator."""
    h_idx = pl.program_id(1)

    @pl.when(h_idx == 0)
    def _init():
        acc_ref[...] = jnp.zeros_like(acc_ref)

    h = jnp.dot(x_ref[...], w1_ref[...], preferred_element_type=jnp.float32)
    h = _gelu(h + b1_ref[...], approximate_gelu)
    acc_ref[...] += jnp.dot(h.astype(w2_ref.dtype), w2_ref[...],
                            preferred_element_type=jnp.float32)

    @pl.when(h_idx == pl.num_programs(1) - 1)
    def _finalize():
        # bias b2 added exactly once
        o_ref[...] = (acc_ref[...] + b2_ref[...]).astype(o_ref.dtype)


# ---------------------------------------------------------------------------
# Single-buffering support (pipeline_mode=pl.Buffered(1)) detection
# ---------------------------------------------------------------------------
def _detect_buffered():
    try:
        pl.BlockSpec((8, 128), lambda i: (0, 0), pipeline_mode=pl.Buffered(1))
        return True
    except Exception:
        return False


_BUFFERED_OK = _detect_buffered()


def _const_spec(shape, index_map):
    """BlockSpec for an array whose block index is constant over the grid."""
    if _BUFFERED_OK:
        return pl.BlockSpec(shape, index_map, pipeline_mode=pl.Buffered(1))
    return pl.BlockSpec(shape, index_map)


# ---------------------------------------------------------------------------
# Wrapper
# ---------------------------------------------------------------------------
def mlp_pallas(x, w1, b1, w2, b2, *, approximate_gelu=False):
    """x: [..., D_in] -> [..., D_out].  Weights stored as (in, out).

    Pass bf16 x/w1/w2 (biases may stay f32) for the fast single-pass bf16 MXU
    path; matmuls always accumulate in f32.
    """
    orig_lead = x.shape[:-1]
    D_in = x.shape[-1]
    H = w1.shape[1]
    D_out = w2.shape[1]
    N = 1
    for d in orig_lead:
        N *= d
    x2d = x.reshape(N, D_in)

    in_bytes = jnp.dtype(x.dtype).itemsize
    w_bytes = jnp.dtype(w1.dtype).itemsize

    D_in_pad = _round_up(D_in, 128)
    D_out_pad = _round_up(D_out, 128)
    H128 = _round_up(H, 128)

    # ---- generation-aware VMEM budget --------------------------------------
    try:
        info = pltpu.get_tpu_info()
        vmem_cap = int(getattr(info, "vmem_capacity_bytes", 128 << 20))
    except Exception:
        vmem_cap = 128 << 20
    budget = vmem_cap - (8 << 20)

    def footprint(tm, th, n_h):
        # weights single-buffered only when resident (constant index) and supported
        wbufs = (1 if _BUFFERED_OK else 2) if n_h == 1 else 2
        acc = 0 if n_h == 1 else tm * D_out_pad * 4
        return (2 * tm * D_in_pad * in_bytes            # x tile (double-buffered)
                + wbufs * D_in_pad * th * w_bytes       # w1 tile
                + wbufs * 8 * th * w_bytes              # b1 tile (sublane-padded)
                + wbufs * th * D_out_pad * w_bytes      # w2 tile
                + 8 * D_out_pad * w_bytes               # b2
                + 2 * tm * D_out_pad * in_bytes         # out tile (double-buffered)
                + acc)                                  # f32 accumulator scratch

    # ---- tile selection -----------------------------------------------------
    row_cap = _round_up(N, 8)
    tm_cands = sorted({min(t, row_cap) for t in (512, 256, 128, 64, 32, 16, 8)},
                      reverse=True)

    tm_eff = th_eff = None
    n_h = 1
    # 1st choice: weights resident (n_h == 1), largest row tile that fits.
    for tm in tm_cands:
        if footprint(tm, H128, 1) <= budget:
            tm_eff, th_eff, n_h = tm, H128, 1
            break
    # Otherwise tile the hidden dim: keep the row tile large, shrink th.
    if tm_eff is None:
        th_cands = sorted({min(t, H128) for t in (4096, 2048, 1024, 512, 256, 128)},
                          reverse=True)
        found = False
        for tm in tm_cands:
            for th in th_cands:
                nh = _cdiv(H128, th)
                if footprint(tm, th, nh) <= budget:
                    tm_eff, th_eff, n_h = tm, th, nh
                    found = True
                    break
            if found:
                break
    if tm_eff is None:  # last resort: minimal tiles
        tm_eff, th_eff = tm_cands[-1], 128
        n_h = _cdiv(H128, th_eff)

    # v7x: give the "parallel" row axis >= 2 tiles when weights are resident so
    # both TensorCores get work (free: no extra HBM traffic with resident weights).
    if n_h == 1 and N > 8 and _round_up(N, tm_eff) // tm_eff < 2:
        tm_eff = min(tm_eff, max(8, _round_up(_cdiv(N, 2), 8)))

    H_pad = th_eff * n_h
    N_pad = _round_up(N, tm_eff)
    n_rows = N_pad // tm_eff

    # ---- padding (only when actually needed) --------------------------------
    def _pad2(a, rows, cols):
        pr, pc = rows - a.shape[0], cols - a.shape[1]
        if pr or pc:
            return jnp.pad(a, ((0, pr), (0, pc)))
        return a

    x_p = _pad2(x2d, N_pad, D_in_pad)
    w1_p = _pad2(w1, D_in_pad, H_pad)
    b1_p = _pad2(b1.reshape(1, H), 1, H_pad)
    w2_p = _pad2(w2, H_pad, D_out_pad)
    b2_p = _pad2(b2.reshape(1, D_out), 1, D_out_pad)

    # ---- compiler params / cost estimate ------------------------------------
    fp = footprint(tm_eff, th_eff, n_h)
    vmem_limit = int(min(max(fp + (4 << 20), 32 << 20), vmem_cap - (2 << 20)))

    cost = pl.CostEstimate(
        flops=2 * N * (D_in * H + H * D_out),
        transcendentals=N * H,
        bytes_accessed=(N * D_in + N * D_out) * in_bytes
                       + (D_in * H + H + H * D_out + D_out) * w_bytes,
    )

    if n_h == 1:
        kernel = functools.partial(_mlp_kernel_fused,
                                   approximate_gelu=approximate_gelu)
        out = pl.pallas_call(
            kernel,
            out_shape=jax.ShapeDtypeStruct((N_pad, D_out_pad), x.dtype),
            grid_spec=pltpu.PrefetchScalarGridSpec(
                num_scalar_prefetch=0,
                grid=(n_rows,),
                in_specs=[
                    pl.BlockSpec((tm_eff, D_in_pad), lambda i: (i, 0)),   # x
                    _const_spec((D_in_pad, H_pad), lambda i: (0, 0)),     # w1
                    _const_spec((1, H_pad), lambda i: (0, 0)),            # b1
                    _const_spec((H_pad, D_out_pad), lambda i: (0, 0)),    # w2
                    _const_spec((1, D_out_pad), lambda i: (0, 0)),        # b2
                ],
                out_specs=pl.BlockSpec((tm_eff, D_out_pad), lambda i: (i, 0)),
                scratch_shapes=[],
            ),
            compiler_params=pltpu.CompilerParams(
                dimension_semantics=("parallel",),
                vmem_limit_bytes=vmem_limit,
            ),
            cost_estimate=cost,
        )(x_p, w1_p, b1_p, w2_p, b2_p)
    else:
        kernel = functools.partial(_mlp_kernel_htiled,
                                   approximate_gelu=approximate_gelu)
        out = pl.pallas_call(
            kernel,
            out_shape=jax.ShapeDtypeStruct((N_pad, D_out_pad), x.dtype),
            grid_spec=pltpu.PrefetchScalarGridSpec(
                num_scalar_prefetch=0,
                grid=(n_rows, n_h),
                in_specs=[
                    pl.BlockSpec((tm_eff, D_in_pad), lambda i, h: (i, 0)),   # x
                    pl.BlockSpec((D_in_pad, th_eff), lambda i, h: (0, h)),   # w1
                    pl.BlockSpec((1, th_eff), lambda i, h: (0, h)),          # b1
                    pl.BlockSpec((th_eff, D_out_pad), lambda i, h: (h, 0)),  # w2
                    _const_spec((1, D_out_pad), lambda i, h: (0, 0)),        # b2
                ],
                out_specs=pl.BlockSpec((tm_eff, D_out_pad), lambda i, h: (i, 0)),
                scratch_shapes=[pltpu.VMEM((tm_eff, D_out_pad), jnp.float32)],
            ),
            compiler_params=pltpu.CompilerParams(
                dimension_semantics=("parallel", "arbitrary"),
                vmem_limit_bytes=vmem_limit,
            ),
            cost_estimate=cost,
        )(x_p, w1_p, b1_p, w2_p, b2_p)

    if N_pad != N or D_out_pad != D_out:
        out = out[:N, :D_out]
    return out.reshape(*orig_lead, D_out)


def mlp_reference(x, w1, b1, w2, b2):
    h = jnp.einsum("bsd,dh->bsh", x, w1) + b1
    h = 0.5 * h * (1.0 + jax.lax.erf(h * _INV_SQRT_2))
    return jnp.einsum("bsh,ho->bso", h, w2) + b2


if __name__ == "__main__":
    # small shapes consistent with the module
    B, S = 2, 8
    in_features, hidden_features, out_features = 32, 64, 32

    key = jax.random.PRNGKey(0)
    kx, k1, k2, k3, k4 = jax.random.split(key, 5)

    x = jax.random.normal(kx, (B, S, in_features), dtype=jnp.float32)

    # deterministic parameter init (mimics nn.Linear uniform fan-in scaling)
    bound1 = 1.0 / (in_features ** 0.5)
    bound2 = 1.0 / (hidden_features ** 0.5)
    w1 = jax.random.uniform(k1, (in_features, hidden_features),
                            minval=-bound1, maxval=bound1, dtype=jnp.float32)
    b1 = jax.random.uniform(k2, (hidden_features,),
                            minval=-bound1, maxval=bound1, dtype=jnp.float32)
    w2 = jax.random.uniform(k3, (hidden_features, out_features),
                            minval=-bound2, maxval=bound2, dtype=jnp.float32)
    b2 = jax.random.uniform(k4, (out_features,),
                            minval=-bound2, maxval=bound2, dtype=jnp.float32)

    y = mlp_pallas(x, w1, b1, w2, b2)
    y = jax.block_until_ready(y)

    y_ref = mlp_reference(x, w1, b1, w2, b2)
    assert y.shape == (B, S, out_features)
    assert jnp.allclose(y, y_ref, atol=1e-5, rtol=1e-5), \
        float(jnp.max(jnp.abs(y - y_ref)))

    print("KERNEL_OK")
</pallas_src>

<mosaic_0001>
module attributes {stable_mosaic.version = 11 : i64} {
  func.func @_mlp_kernel_fused(%arg0: i32, %arg1: memref<8x128xf32, #tpu.memory_space<vmem>>, %arg2: memref<128x128xf32, #tpu.memory_space<vmem>>, %arg3: memref<1x128xf32, #tpu.memory_space<vmem>>, %arg4: memref<128x128xf32, #tpu.memory_space<vmem>>, %arg5: memref<1x128xf32, #tpu.memory_space<vmem>>, %arg6: memref<8x128xf32, #tpu.memory_space<vmem>>) attributes {dimension_semantics = [#tpu.dimension_semantics<parallel>], iteration_bounds = array<i64: 2>, scalar_prefetch = 0 : i64, scratch_operands = 0 : i64, tpu.core_type = #tpu.core_type<tc>, window_params = [{transform_indices = @transform_0, window_bounds = array<i64: 8, 128>}, {pipeline_mode = #tpu.pipeline_mode<synchronous>, transform_indices = @transform_1, window_bounds = array<i64: 128, 128>}, {pipeline_mode = #tpu.pipeline_mode<synchronous>, transform_indices = @transform_2, window_bounds = array<i64: 1, 128>}, {pipeline_mode = #tpu.pipeline_mode<synchronous>, transform_indices = @transform_3, window_bounds = array<i64: 128, 128>}, {pipeline_mode = #tpu.pipeline_mode<synchronous>, transform_indices = @transform_4, window_bounds = array<i64: 1, 128>}, {transform_indices = @transform_5, window_bounds = array<i64: 8, 128>}]} {
    %c0 = arith.constant 0 : index
    %c0_0 = arith.constant 0 : index
    %0 = vector.load %arg1[%c0, %c0_0] : memref<8x128xf32, #tpu.memory_space<vmem>>, vector<8x128xf32>
    %c0_1 = arith.constant 0 : index
    %c0_2 = arith.constant 0 : index
    %1 = vector.load %arg2[%c0_1, %c0_2] : memref<128x128xf32, #tpu.memory_space<vmem>>, vector<128x128xf32>
    %cst = arith.constant dense<0.000000e+00> : vector<8x128xf32>
    %2 = tpu.matmul %0, %1, %cst {dimension_numbers = #tpu.dot_dimension_numbers<[1], [0], [0], [1], [0, 0, 1, 1], [], []>} : vector<8x128xf32>, vector<128x128xf32>, vector<8x128xf32> -> vector<8x128xf32>
    %c0_3 = arith.constant 0 : index
    %c0_4 = arith.constant 0 : index
    %3 = vector.load %arg3[%c0_3, %c0_4] : memref<1x128xf32, #tpu.memory_space<vmem>>, vector<1x128xf32>
    %4 = vector.broadcast %3 : vector<1x128xf32> to vector<8x128xf32>
    %5 = arith.addf %2, %4 : vector<8x128xf32>
    %cst_5 = arith.constant 5.000000e-01 : f32
    %6 = vector.broadcast %cst_5 : f32 to vector<8x128xf32>
    %7 = arith.mulf %6, %5 : vector<8x128xf32>
    %cst_6 = arith.constant 0.707106769 : f32
    %8 = vector.broadcast %cst_6 : f32 to vector<8x128xf32>
    %9 = arith.mulf %5, %8 : vector<8x128xf32>
    %10 = math.erf %9 : vector<8x128xf32>
    %cst_7 = arith.constant 1.000000e+00 : f32
    %11 = vector.broadcast %cst_7 : f32 to vector<8x128xf32>
    %12 = arith.addf %11, %10 : vector<8x128xf32>
    %13 = arith.mulf %7, %12 : vector<8x128xf32>
    %c0_8 = arith.constant 0 : index
    %c0_9 = arith.constant 0 : index
    %14 = vector.load %arg4[%c0_8, %c0_9] : memref<128x128xf32, #tpu.memory_space<vmem>>, vector<128x128xf32>
    %cst_10 = arith.constant dense<0.000000e+00> : vector<8x128xf32>
    %15 = tpu.matmul %13, %14, %cst_10 {dimension_numbers = #tpu.dot_dimension_numbers<[1], [0], [0], [1], [0, 0, 1, 1], [], []>} : vector<8x128xf32>, vector<128x128xf32>, vector<8x128xf32> -> vector<8x128xf32>
    %c0_11 = arith.constant 0 : index
    %c0_12 = arith.constant 0 : index
    %16 = vector.load %arg5[%c0_11, %c0_12] : memref<1x128xf32, #tpu.memory_space<vmem>>, vector<1x128xf32>
    %17 = vector.broadcast %16 : vector<1x128xf32> to vector<8x128xf32>
    %18 = arith.addf %15, %17 : vector<8x128xf32>
    %c0_13 = arith.constant 0 : index
    %c0_14 = arith.constant 0 : index
    %19 = vector.load %arg6[%c0_13, %c0_14] : memref<8x128xf32, #tpu.memory_space<vmem>>, vector<8x128xf32>
    tpu.vector_store %arg6[%c0_13, %c0_14], %18 {strides = array<i32>} : memref<8x128xf32, #tpu.memory_space<vmem>>, vector<8x128xf32>,
    return
  }
  func.func @transform_0(%arg0: i32) -> (i32, i32) {
    %c0_i32 = arith.constant 0 : i32
    %c0_i32_0 = arith.constant 0 : i32
    return %arg0, %c0_i32 : i32, i32
  }
  func.func @transform_1(%arg0: i32) -> (i32, i32) {
    %c0_i32 = arith.constant 0 : i32
    %c0_i32_0 = arith.constant 0 : i32
    %c0_i32_1 = arith.constant 0 : i32
    return %c0_i32, %c0_i32_0 : i32, i32
  }
  func.func @transform_2(%arg0: i32) -> (i32, i32) {
    %c0_i32 = arith.constant 0 : i32
    %c0_i32_0 = arith.constant 0 : i32
    %c0_i32_1 = arith.constant 0 : i32
    return %c0_i32, %c0_i32_0 : i32, i32
  }
  func.func @transform_3(%arg0: i32) -> (i32, i32) {
    %c0_i32 = arith.constant 0 : i32
    %c0_i32_0 = arith.constant 0 : i32
    %c0_i32_1 = arith.constant 0 : i32
    return %c0_i32, %c0_i32_0 : i32, i32
  }
  func.func @transform_4(%arg0: i32) -> (i32, i32) {
    %c0_i32 = arith.constant 0 : i32
    %c0_i32_0 = arith.constant 0 : i32
    %c0_i32_1 = arith.constant 0 : i32
    return %c0_i32, %c0_i32_0 : i32, i32
  }
  func.func @transform_5(%arg0: i32) -> (i32, i32) {
    %c0_i32 = arith.constant 0 : i32
    %c0_i32_0 = arith.constant 0 : i32
    return %arg0, %c0_i32 : i32, i32
  }
}

</mosaic_0001>

<llo_original>
// kernel: tpu_custom_call.1
$region0: #{tpu_custom_call.1}
  #allocation0 [shape = 'u32[]', space=smem, size = 0x4, offset = 0x4, fixed_abs, tag = 'smem constant byte address 0x4 - core index']
  #allocation1 [shape = 'u32[72,128]{1,0:T(1,128)}', space=vmem, size = 0x9000, scoped, tag = 'internal scratch']
  %s0 = inlined_call_operand.hbm [shape: f32[16,128], index: 0, kind: input, shape index: {}]
  %s1 = inlined_call_operand.hbm [shape: f32[128,128], index: 1, kind: input, shape index: {}]
  %s2 = inlined_call_operand.vmem [shape: f32[1,128], index: 2, kind: input, shape index: {}]
  %s3 = inlined_call_operand.hbm [shape: f32[128,128], index: 3, kind: input, shape index: {}]
  %s4 = inlined_call_operand.vmem [shape: f32[1,128], index: 4, kind: input, shape index: {}]
  %s5 = inlined_call_operand.hbm [shape: f32[16,128], index: 5, kind: output, shape index: {}]
  %s6 = sld [smem:[#allocation0]]
  $region65: #{tpu_custom_call.1} parent=0
    _
  %s8 = ssub.s32 1, %s6
  %s9 = scalar_select 0, %s8, %s6
  $region1: #{tpu_custom_call.1} parent=0
    #allocation2 [shape = 'u8[8192]{0}', space=vmem, size = 0x2000, scoped, tag = 'input window, operand 0']
    #allocation3 [shape = 's32[2]{0}', space=sflag, size = 0x8, scoped, tag = 'scoped memory for tpu_custom_call.1']
    #allocation4 [shape = 's32[2]{0}', space=sflag, size = 0x8, scoped, tag = 'scoped memory for tpu_custom_call.1']
    #allocation5 [shape = 'u8[65536]{0}', space=vmem, size = 0x10000, scoped, tag = 'input window, operand 1, single buffered']
    #allocation6 [shape = 's32[1]{0}', space=sflag, size = 0x4, scoped, tag = 'scoped memory for tpu_custom_call.1']
    #allocation7 [shape = 'u8[65536]{0}', space=vmem, size = 0x10000, scoped, tag = 'input window, operand 3, single buffered']
    #allocation8 [shape = 'u8[8192]{0}', space=vmem, size = 0x2000, scoped, tag = 'output window, operand 0']
    %10 = vsyncpa [#allocation3], 0
    %s11 = scalar_lea.sflag [#allocation3], 1
    %12 = vsyncpa %s11, 0
    %13 = vsyncpa [#allocation6], 0
    %14 = vsyncpa [#allocation4], 0
    %s15 = scalar_lea.sflag [#allocation4], 1
    %16 = vsyncpa %s15, 0
    loop: start=0, step=1, limit=4
    $region2: #{tpu_custom_call.1} parent=1 // loop_pre_header
      _
    $region3: #{tpu_custom_call.1} parent=1 // loop_header
      %s18 = sphi 0, %s22
      %p19 = scmp.ge.s32.totalorder %s18, 4
      %s28 = sphi 0, %s30
      %s31 = sphi 0, %s28
      %s32 = sphi 0, %s31
      %s48 = sphi 0, %s32
      %s52 = sphi 0, %s52
      %s54 = sphi 0, %s52
      %s55 = sphi 0, %s54
      %s69 = sphi 0, %s55
      %s73 = sphi 0, %s73
      %s75 = sphi 0, %s73
      %s76 = sphi 0, %s75
      %s90 = sphi 0, %s76
      %s94 = sphi 0, %s94
      %s96 = sphi 0, %s94
      %s97 = sphi 0, %s96
      %s111 = sphi 0, %s97
      %s115 = sphi 0, %s115
      %s117 = sphi 0, %s115
      %s118 = sphi 0, %s117
      %s132 = sphi 0, %s118
      %s138 = sphi 0, %s140
      %s141 = sphi 0, %s138
      %s142 = sphi 0, %s141
      %s158 = sphi 0, %s142
    $region4: #{tpu_custom_call.1} parent=1 // loop_header_branch
      %21 = sbr.rel (%p19) target = $region8
    $region5: #{tpu_custom_call.1} parent=1 // loop_body
      %s23 = ssub.s32 %s18, 1
      %s24 = ssub.s32 %s18, 2
      %s25 = sadd.s32 %s18, 1
      %s26 = ssub.s32 %s18, %s25
      %p27 = scmp.eq.s32.totalorder %s26, 0
      %s29 = sadd.s32 %s28, 1
      %s30 = scalar_select %p27, %s28, %s29
      %p33 = pneg %p27
      %p34 = scmp.eq.s32.totalorder %s18, 1
      %p35 = por %p33, %p34
      %p36 = scmp.ne.s32.totalorder %s28, %s31
      %p37 = scmp.eq.s32.totalorder %s18, 0
      %p38 = por %p36, %p37
      %p39 = scmp.ne.s32.totalorder %s28, %s31
      %p40 = scmp.eq.s32.totalorder %s23, 1
      %p41 = por %p39, %p40
      %p42 = scmp.ne.s32.totalorder %s31, %s32
      %p43 = scmp.eq.s32.totalorder %s23, 0
      %p44 = por %p42, %p43
      %p45 = scmp.ne.s32.totalorder %s31, %s32
      %p46 = scmp.eq.s32.totalorder %s24, 1
      %p47 = por %p45, %p46
      %p49 = scmp.ne.s32.totalorder %s32, %s48
      %p50 = scmp.eq.s32.totalorder %s24, 0
      %p51 = por %p49, %p50
      %s53 = sadd.s32 %s52, 1
      %p56 = scmp.eq.s32.totalorder %s18, 1
      %p57 = scmp.ne.s32.totalorder %s52, %s54
      %p58 = scmp.eq.s32.totalorder %s18, 0
      %p59 = por %p57, %p58
      %p60 = scmp.ne.s32.totalorder %s52, %s54
      %p61 = scmp.eq.s32.totalorder %s23, 1
      %p62 = por %p60, %p61
      %p63 = scmp.ne.s32.totalorder %s54, %s55
      %p64 = scmp.eq.s32.totalorder %s23, 0
      %p65 = por %p63, %p64
      %p66 = scmp.ne.s32.totalorder %s54, %s55
      %p67 = scmp.eq.s32.totalorder %s24, 1
      %p68 = por %p66, %p67
      %p70 = scmp.ne.s32.totalorder %s55, %s69
      %p71 = scmp.eq.s32.totalorder %s24, 0
      %p72 = por %p70, %p71
      %s74 = sadd.s32 %s73, 1
      %p77 = scmp.eq.s32.totalorder %s18, 1
      %p78 = scmp.ne.s32.totalorder %s73, %s75
      %p79 = scmp.eq.s32.totalorder %s18, 0
      %p80 = por %p78, %p79
      %p81 = scmp.ne.s32.totalorder %s73, %s75
      %p82 = scmp.eq.s32.totalorder %s23, 1
      %p83 = por %p81, %p82
      %p84 = scmp.ne.s32.totalorder %s75, %s76
      %p85 = scmp.eq.s32.totalorder %s23, 0
      %p86 = por %p84, %p85
      %p87 = scmp.ne.s32.totalorder %s75, %s76
      %p88 = scmp.eq.s32.totalorder %s24, 1
      %p89 = por %p87, %p88
      %p91 = scmp.ne.s32.totalorder %s76, %s90
      %p92 = scmp.eq.s32.totalorder %s24, 0
      %p93 = por %p91, %p92
      %s95 = sadd.s32 %s94, 1
      %p98 = scmp.eq.s32.totalorder %s18, 1
      %p99 = scmp.ne.s32.totalorder %s94, %s96
      %p100 = scmp.eq.s32.totalorder %s18, 0
      %p101 = por %p99, %p100
      %p102 = scmp.ne.s32.totalorder %s94, %s96
      %p103 = scmp.eq.s32.totalorder %s23, 1
      %p104 = por %p102, %p103
      %p105 = scmp.ne.s32.totalorder %s96, %s97
      %p106 = scmp.eq.s32.totalorder %s23, 0
      %p107 = por %p105, %p106
      %p108 = scmp.ne.s32.totalorder %s96, %s97
      %p109 = scmp.eq.s32.totalorder %s24, 1
      %p110 = por %p108, %p109
      %p112 = scmp.ne.s32.totalorder %s97, %s111
      %p113 = scmp.eq.s32.totalorder %s24, 0
      %p114 = por %p112, %p113
      %s116 = sadd.s32 %s115, 1
      %p119 = scmp.eq.s32.totalorder %s18, 1
      %p120 = scmp.ne.s32.totalorder %s115, %s117
      %p121 = scmp.eq.s32.totalorder %s18, 0
      %p122 = por %p120, %p121
      %p123 = scmp.ne.s32.totalorder %s115, %s117
      %p124 = scmp.eq.s32.totalorder %s23, 1
      %p125 = por %p123, %p124
      %p126 = scmp.ne.s32.totalorder %s117, %s118
      %p127 = scmp.eq.s32.totalorder %s23, 0
      %p128 = por %p126, %p127
      %p129 = scmp.ne.s32.totalorder %s117, %s118
      %p130 = scmp.eq.s32.totalorder %s24, 1
      %p131 = por %p129, %p130
      %p133 = scmp.ne.s32.totalorder %s118, %s132
      %p134 = scmp.eq.s32.totalorder %s24, 0
      %p135 = por %p133, %p134
      %s136 = ssub.s32 %s18, %s25
      %p137 = scmp.eq.s32.totalorder %s136, 0
      %s139 = sadd.s32 %s138, 1
      %s140 = scalar_select %p137, %s138, %s139
      %p143 = pneg %p137
      %p144 = scmp.eq.s32.totalorder %s18, 1
      %p145 = por %p143, %p144
      %p146 = scmp.ne.s32.totalorder %s138, %s141
      %p147 = scmp.eq.s32.totalorder %s18, 0
      %p148 = por %p146, %p147
      %p149 = scmp.ne.s32.totalorder %s138, %s141
      %p150 = scmp.eq.s32.totalorder %s23, 1
      %p151 = por %p149, %p150
      %p152 = scmp.ne.s32.totalorder %s141, %s142
      %p153 = scmp.eq.s32.totalorder %s23, 0
      %p154 = por %p152, %p153
      %p155 = scmp.ne.s32.totalorder %s141, %s142
      %p156 = scmp.eq.s32.totalorder %s24, 1
      %p157 = por %p155, %p156
      %p159 = scmp.ne.s32.totalorder %s142, %s158
      %p160 = scmp.eq.s32.totalorder %s24, 0
      %p161 = por %p159, %p160
      %p162 = scmp.le.s32.totalorder 1, %s18
      %p163 = scmp.lt.s32.totalorder %s18, 3
      %p164 = pnand %p162, %p163
      %p165 = pneg %p164
      // Predicated region
      $region9: #{tpu_custom_call.1} parent=5 // pred_check
        _
      $region10: #{tpu_custom_call.1} parent=5 // pred_check_branch
        %167 = sbr.rel (%p164) target = $region12
      $region11: #{tpu_custom_call.1} parent=5 // pred_region
        %s168 = ssub.s32 %s18, 1
        // Predicated region
        $region13: #{tpu_custom_call.1} parent=11 // pred_check
          %p169 = pneg %p65
        $region14: #{tpu_custom_call.1} parent=11 // pred_check_branch
          %171 = sbr.rel (%p169) target = $region16
        $region15: #{tpu_custom_call.1} parent=11 // pred_region
          %173 = vsyncadd [#allocation6], 0
          %s174 = sshll.u32 %s1, 4
          %s175 = int_to_ptr.hbm [resolvable:$true] %s174
          %s176 = sshll.u32 [#allocation5], 4
          %s177 = int_to_ptr.vmem [resolvable:$true] %s176
          %182 = dma.hbm_to_vmem [thread:$0]  %s175, 2048, %s177, [#allocation6], 128, 128, 8
        $region16: #{tpu_custom_call.1} parent=11 // pred_fallthru
          _
        // Predicated region
        $region17: #{tpu_custom_call.1} parent=11 // pred_check
          %p183 = pneg %p86
        $region18: #{tpu_custom_call.1} parent=11 // pred_check_branch
          %185 = sbr.rel (%p183) target = $region20
        $region19: #{tpu_custom_call.1} parent=11 // pred_region
          _
        $region20: #{tpu_custom_call.1} parent=11 // pred_fallthru
          _
        // Predicated region
        $region21: #{tpu_custom_call.1} parent=11 // pred_check
          %p186 = pneg %p107
        $region22: #{tpu_custom_call.1} parent=11 // pred_check_branch
          %188 = sbr.rel (%p186) target = $region24
        $region23: #{tpu_custom_call.1} parent=11 // pred_region
          %190 = vsyncadd [#allocation6], 0
          %s191 = sshll.u32 %s3, 4
          %s192 = int_to_ptr.hbm [resolvable:$true] %s191
          %s193 = sshll.u32 [#allocation7], 4
          %s194 = int_to_ptr.vmem [resolvable:$true] %s193
          %199 = dma.hbm_to_vmem [thread:$0]  %s192, 2048, %s194, [#allocation6], 128, 128, 8
        $region24: #{tpu_custom_call.1} parent=11 // pred_fallthru
          _
        // Predicated region
        $region25: #{tpu_custom_call.1} parent=11 // pred_check
          %p200 = pneg %p128
        $region26: #{tpu_custom_call.1} parent=11 // pred_check_branch
          %202 = sbr.rel (%p200) target = $region28
        $region27: #{tpu_custom_call.1} parent=11 // pred_region
          _
        $region28: #{tpu_custom_call.1} parent=11 // pred_fallthru
          _
      $region12: #{tpu_custom_call.1} parent=5 // pred_fallthru
        _
      %p203 = scmp.lt.s32.totalorder %s18, 2
      // Predicated region
      $region29: #{tpu_custom_call.1} parent=5 // pred_check
        %p204 = pneg %p203
      $region30: #{tpu_custom_call.1} parent=5 // pred_check_branch
        %206 = sbr.rel (%p204) target = $region32
      $region31: #{tpu_custom_call.1} parent=5 // pred_region
        // Predicated region
        $region33: #{tpu_custom_call.1} parent=31 // pred_check
          %p207 = pneg %p38
        $region34: #{tpu_custom_call.1} parent=31 // pred_check_branch
          %209 = sbr.rel (%p207) target = $region36
        $region35: #{tpu_custom_call.1} parent=31 // pred_region
          %s210 = sand.u32 %s28, 1
          %s211 = scalar_lea.sflag [#allocation3], %s210
          %s212 = sand.u32 %s28, 1
          %s213 = smul.addr %s212, 8
          %s214 = scalar_lea.vmem [#allocation2], %s213
          %216 = vsyncadd %s211, 0
          %s217 = smul.addr %s18, 8
          %s218 = scalar_lea.hbm %s0, %s217
          %s220 = sshll.u32 %s218, 4
          %s221 = int_to_ptr.hbm [resolvable:$true] %s220
          %s222 = sshll.u32 %s214, 4
          %s223 = int_to_ptr.vmem [resolvable:$true] %s222
          %225 = dma.hbm_to_vmem [thread:$0]  %s221, 128, %s223, %s211
        $region36: #{tpu_custom_call.1} parent=31 // pred_fallthru
          _
      $region32: #{tpu_custom_call.1} parent=5 // pred_fallthru
        _
      %p226 = scmp.le.s32.totalorder 1, %s18
      %p227 = scmp.lt.s32.totalorder %s18, 3
      %p228 = pnand %p226, %p227
      %p229 = pneg %p228
      // Predicated region
      $region37: #{tpu_custom_call.1} parent=5 // pred_check
        _
      $region38: #{tpu_custom_call.1} parent=5 // pred_check_branch
        %231 = sbr.rel (%p228) target = $region40
      $region39: #{tpu_custom_call.1} parent=5 // pred_region
        %s232 = ssub.s32 %s18, 1
        %s233 = sand.u32 %s31, 1
        %s234 = scalar_lea.sflag [#allocation3], %s233
        %s235 = sand.u32 %s31, 1
        %s236 = smul.addr %s235, 8
        %s237 = scalar_lea.vmem [#allocation2], %s236
        // Predicated region
        $region41: #{tpu_custom_call.1} parent=39 // pred_check
          %p238 = pneg %p44
        $region42: #{tpu_custom_call.1} parent=39 // pred_check_branch
          %240 = sbr.rel (%p238) target = $region44
        $region43: #{tpu_custom_call.1} parent=39 // pred_region
          %242 = dma.done %s234, 128
        $region44: #{tpu_custom_call.1} parent=39 // pred_fallthru
          _
        // Predicated region
        $region45: #{tpu_custom_call.1} parent=39 // pred_check
          %p243 = pneg %p65
        $region46: #{tpu_custom_call.1} parent=39 // pred_check_branch
          %245 = sbr.rel (%p243) target = $region48
        $region47: #{tpu_custom_call.1} parent=39 // pred_region
          %247 = dma.done [#allocation6], 2048
        $region48: #{tpu_custom_call.1} parent=39 // pred_fallthru
          _
        // Predicated region
        $region49: #{tpu_custom_call.1} parent=39 // pred_check
          %p248 = pneg %p107
        $region50: #{tpu_custom_call.1} parent=39 // pred_check_branch
          %250 = sbr.rel (%p248) target = $region52
        $region51: #{tpu_custom_call.1} parent=39 // pred_region
          %252 = dma.done [#allocation6], 2048
        $region52: #{tpu_custom_call.1} parent=39 // pred_fallthru
          _
        %s253 = sand.u32 %s31, 1
        %s254 = scalar_lea.sflag [#allocation3], %s253
        %s255 = sand.u32 %s31, 1
        %s256 = smul.addr %s255, 8
        %s257 = scalar_lea.vmem [#allocation2], %s256
        %p258 = pneg %p44
        %p259 = pneg %p41
        %p260 = pneg %p65
        %p261 = pneg %p62
        %p262 = pneg %p86
        %p263 = pneg %p83
        %p264 = pneg %p107
        %p265 = pneg %p104
        %p266 = pneg %p128
        %p267 = pneg %p125
        %p268 = pneg %p154
        %p269 = pneg %p151
        %s270 = sand.u32 %s141, 1
        %s271 = scalar_lea.sflag [#allocation4], %s270
        %s272 = sand.u32 %s141, 1
        %s273 = smul.addr %s272, 8
        %s274 = scalar_lea.vmem [#allocation8], %s273
        %v275 = vld [vmem:[%s237] sm:$0xff]
        %v276 = vld [vmem:[#allocation5] sm:$0xff]
        %v277 = vld [vmem:[#allocation5 + $0x8] sm:$0xff]
        %v278 = vld [vmem:[#allocation5 + $0x10] sm:$0xff]
        %v279 = vld [vmem:[#allocation5 + $0x18] sm:$0xff]
        %v280 = vld [vmem:[#allocation5 + $0x20] sm:$0xff]
        %v281 = vld [vmem:[#allocation5 + $0x28] sm:$0xff]
        %v282 = vld [vmem:[#allocation5 + $0x30] sm:$0xff]
        %v283 = vld [vmem:[#allocation5 + $0x38] sm:$0xff]
        %v284 = vld [vmem:[#allocation5 + $0x40] sm:$0xff]
        %v285 = vld [vmem:[#allocation5 + $0x48] sm:$0xff]
        %v286 = vld [vmem:[#allocation5 + $0x50] sm:$0xff]
        %v287 = vld [vmem:[#allocation5 + $0x58] sm:$0xff]
        %v288 = vld [vmem:[#allocation5 + $0x60] sm:$0xff]
        %v289 = vld [vmem:[#allocation5 + $0x68] sm:$0xff]
        %v290 = vld [vmem:[#allocation5 + $0x70] sm:$0xff]
        %v291 = vld [vmem:[#allocation5 + $0x78] sm:$0xff]
        %v292 = vld [vmem:[%s2] sm:$0x1]
        %v294 = vperm.slane %v292, 0
        %296 = vmatpush.msra.mxu0 %v291
        %297 = vmatpush.msra.mxu0 %v290
        %298 = vmatpush.msra.mxu0 %v289
        %299 = vmatpush.msra.mxu0 %v288
        %300 = vmatpush.msra.mxu0 %v287
        %301 = vmatpush.msra.mxu0 %v286
        %302 = vmatpush.msra.mxu0 %v285
        %303 = vmatpush.msra.mxu0 %v284
        %304 = vmatpush.msra.mxu0 %v283
        %305 = vmatpush.msra.mxu0 %v282
        %306 = vmatpush.msra.mxu0 %v281
        %307 = vmatpush.msra.mxu0 %v280
        %308 = vmatpush.msra.mxu0 %v279
        %309 = vmatpush.msra.mxu0 %v278
        %310 = vmatpush.msra.mxu0 %v277
        %311 = vmatpush.msra.mxu0 %v276
        %312 = vmatmul.f32.gmra.mxu0 %v275
        %v313 = vpop.f32.mrf.mxu0
        %v314 = vadd.f32 %v294, %v313
        %315 = vdwg.mxu0
        %v316 = vmul.f32 %v314, 0.5
        %v317 = vmul.f32 %v314, 0.70710677
        %v318 = vmul.f32 %v317, %v317
        %v319 = vmin.f32 16.0, %v318
        %v320 = vmul.f32 %v319, 2.1237322e-06
        %v321 = vadd.f32 %v320, 0.00028619796
        %v322 = vmul.f32 %v319, %v321
        %v323 = vadd.f32 %v322, 0.0036580483
        %v324 = vmul.f32 %v319, %v323
        %v325 = vadd.f32 %v324, 0.05243302
        %v326 = vmul.f32 %v319, %v325
        %v327 = vadd.f32 %v326, 0.18741608
        %v328 = vmul.f32 %v319, %v327
        %v329 = vadd.f32 %v328, 1.1283791
        %v330 = vmul.f32 %v317, %v329
        %v331 = vmul.f32 %v319, 3.8918573e-05
        %v332 = vadd.f32 %v331, 0.001143296
        %v333 = vmul.f32 %v319, %v332
        %v334 = vadd.f32 %v333, 0.014752088
        %v335 = vmul.f32 %v319, %v334
        %v336 = vadd.f32 %v335, 0.112945676
        %v337 = vmul.f32 %v319, %v336
        %v338 = vadd.f32 %v337, 0.4994258
        %v339 = vmul.f32 %v319, %v338
        %v340 = vadd.f32 %v339, 1.0
        %v341 = vrcp.pop %v340
        %v342 = vmul.f32 %v340, %v341
        %v343 = vsub.f32 1.0, %v342
        %v344 = vmul.f32 %v341, %v343
        %v345 = vadd.f32 %v341, %v344
        %vm346 = vweird.f32 %v340
        %vm347 = vweird.f32 %v341
        %vm348 = vmor %vm346, %vm347
        %v349 = vsel %vm348, %v341, %v345
        %v350 = vand.u32 2147483647, %v340
        %vm351 = vcmp.eq.f32.partialorder %v350, 8.507059e+37
        %v352 = vand.u32 %v340, 2147483648
        %v353 = vor.u32 1.1754944e-38, %v352
        %v354 = vsel %vm351, %v353, %v349
        %v355 = vmul.f32 %v330, %v354
        %v356 = vmin.f32 %v355, 1.0
        %v357 = vmax.f32 %v356, -1.0
        %v358 = vadd.f32 %v357, 1.0
        %v359 = vmul.f32 %v316, %v358
        %v360 = vld [vmem:[#allocation7] sm:$0xff]
        %v361 = vld [vmem:[#allocation7 + $0x8] sm:$0xff]
        %v362 = vld [vmem:[#allocation7 + $0x10] sm:$0xff]
        %v363 = vld [vmem:[#allocation7 + $0x18] sm:$0xff]
        %v364 = vld [vmem:[#allocation7 + $0x20] sm:$0xff]
        %v365 = vld [vmem:[#allocation7 + $0x28] sm:$0xff]
        %v366 = vld [vmem:[#allocation7 + $0x30] sm:$0xff]
        %v367 = vld [vmem:[#allocation7 + $0x38] sm:$0xff]
        %v368 = vld [vmem:[#allocation7 + $0x40] sm:$0xff]
        %v369 = vld [vmem:[#allocation7 + $0x48] sm:$0xff]
        %v370 = vld [vmem:[#allocation7 + $0x50] sm:$0xff]
        %v371 = vld [vmem:[#allocation7 + $0x58] sm:$0xff]
        %v372 = vld [vmem:[#allocation7 + $0x60] sm:$0xff]
        %v373 = vld [vmem:[#allocation7 + $0x68] sm:$0xff]
        %v374 = vld [vmem:[#allocation7 + $0x70] sm:$0xff]
        %v375 = vld [vmem:[#allocation7 + $0x78] sm:$0xff]
        %v376 = vld [vmem:[%s4] sm:$0x1]
        %v378 = vperm.slane %v376, 0
        %380 = vmatpush.msra.mxu0 %v375
        %381 = vmatpush.msra.mxu0 %v374
        %382 = vmatpush.msra.mxu0 %v373
        %383 = vmatpush.msra.mxu0 %v372
        %384 = vmatpush.msra.mxu0 %v371
        %385 = vmatpush.msra.mxu0 %v370
        %386 = vmatpush.msra.mxu0 %v369
        %387 = vmatpush.msra.mxu0 %v368
        %388 = vmatpush.msra.mxu0 %v367
        %389 = vmatpush.msra.mxu0 %v366
        %390 = vmatpush.msra.mxu0 %v365
        %391 = vmatpush.msra.mxu0 %v364
        %392 = vmatpush.msra.mxu0 %v363
        %393 = vmatpush.msra.mxu0 %v362
        %394 = vmatpush.msra.mxu0 %v361
        %395 = vmatpush.msra.mxu0 %v360
        %396 = vmatmul.f32.gmra.mxu0 %v359
        %v397 = vpop.f32.mrf.mxu0
        %v398 = vadd.f32 %v378, %v397
        %399 = vdwg.mxu0
        %400 = vst [vmem:[%s274] sm:$0xff] %v398
        %s401 = sand.u32 %s141, 1
        %s402 = scalar_lea.sflag [#allocation4], %s401
        %s403 = sand.u32 %s141, 1
        %s404 = smul.addr %s403, 8
        %s405 = scalar_lea.vmem [#allocation8], %s404
        // Predicated region
        $region53: #{tpu_custom_call.1} parent=39 // pred_check
          %p406 = pneg %p151
        $region54: #{tpu_custom_call.1} parent=39 // pred_check_branch
          %408 = sbr.rel (%p406) target = $region56
        $region55: #{tpu_custom_call.1} parent=39 // pred_region
          %410 = vsyncadd %s402, 0
          %s411 = smul.addr %s23, 8
          %s412 = scalar_lea.hbm %s5, %s411
          %s414 = sshll.u32 %s405, 4
          %s415 = int_to_ptr.vmem [resolvable:$true] %s414
          %s416 = sshll.u32 %s412, 4
          %s417 = int_to_ptr.hbm [resolvable:$true] %s416
          %419 = dma.vmem_to_hbm [thread:$0]  %s415, 128, %s417, %s402
        $region56: #{tpu_custom_call.1} parent=39 // pred_fallthru
          _
      $region40: #{tpu_custom_call.1} parent=5 // pred_fallthru
        _
      %p420 = scmp.le.s32.totalorder 2, %s18
      // Predicated region
      $region57: #{tpu_custom_call.1} parent=5 // pred_check
        %p421 = pneg %p420
      $region58: #{tpu_custom_call.1} parent=5 // pred_check_branch
        %423 = sbr.rel (%p421) target = $region60
      $region59: #{tpu_custom_call.1} parent=5 // pred_region
        %s424 = ssub.s32 %s18, 2
        // Predicated region
        $region61: #{tpu_custom_call.1} parent=59 // pred_check
          %p425 = pneg %p157
        $region62: #{tpu_custom_call.1} parent=59 // pred_check_branch
          %427 = sbr.rel (%p425) target = $region64
        $region63: #{tpu_custom_call.1} parent=59 // pred_region
          %s428 = sand.u32 %s142, 1
          %s429 = scalar_lea.sflag [#allocation4], %s428
          %s430 = sand.u32 %s142, 1
          %s431 = smul.addr %s430, 8
          %s432 = scalar_lea.vmem [#allocation8], %s431
          %434 = dma.done %s429, 128
        $region64: #{tpu_custom_call.1} parent=59 // pred_fallthru
          _
      $region60: #{tpu_custom_call.1} parent=5 // pred_fallthru
        _
    $region6: #{tpu_custom_call.1} parent=1 // loop_footer
      %s22 = sadd.s32 1, %s18
    $region7: #{tpu_custom_call.1} parent=1 // loop_footer_branch
      %17 = sbr.rel target = $region3
    $region8: #{tpu_custom_call.1} parent=1 // loop_exit
      _
    %435 = vsyncpa [#allocation3], 1
    %s436 = scalar_lea.sflag [#allocation3], 1
    %437 = vsyncpa %s436, 1
    %438 = vsyncpa [#allocation6], 1
    %439 = vsyncpa [#allocation4], 1
    %s440 = scalar_lea.sflag [#allocation4], 1
    %441 = vsyncpa %s440, 1

</llo_original>
